<compile_context>
chip_gen: v7x
topology: tpu7x:2x2x1
jax: 0.10.0
libtpu: 0.0.40
codegen_flags: <defaults>
</compile_context>

<pallas_src>
import jax
import jax.numpy as jnp
from jax import lax
from jax.experimental import pallas as pl
from jax.experimental.pallas import tpu as pltpu


# ---------------------------------------------------------------------------
# Fused Pallas kernel: LSTM recurrence + hidden2gesture projection
# ---------------------------------------------------------------------------
def jarvis_lstm_kernel(x_ref, wih_ref, whh_ref, b_ref, wlin_ref, blin_ref,
                       out_ref, flat_scr):
    """
    x_ref    : (T*B, I)   bf16  inputs, row m = t*B + b (time-major flatten)
    wih_ref  : (I, 4H)    bf16  input->gates weights (transposed, [i,f,g,o])
    whh_ref  : (H, 4H)    bf16  hidden->gates weights (transposed)
    b_ref    : (1, 4H)    f32   combined bias b_ih + b_hh
    wlin_ref : (T*H, G)   bf16  hidden2gesture weight (transposed)
    blin_ref : (1, G)     f32   hidden2gesture bias
    out_ref  : (B, G)     f32   gesture logits
    flat_scr : (B, T*H)   f32   lstm_out laid out exactly as PyTorch's
                                `.view(batch, -1)` of the contiguous (T, B, H)
    """
    B, G = out_ref.shape
    H = whh_ref.shape[0]
    TH = flat_scr.shape[1]
    T = TH // H

    # Hoisted input projection: ONE MXU call for all timesteps, bias added once.
    xg = (jnp.dot(x_ref[...], wih_ref[...], preferred_element_type=jnp.float32)
          + b_ref[...])                                        # (T*B, 4H) f32

    # Recurrent weight stays resident (bf16 vregs) for the whole unrolled loop.
    whh = whh_ref[...]                                         # (H, 4H) bf16

    def store_h(t, h):
        # Row b of h_t lands at flat[(t*B+b)//T, ((t*B+b)%T)*H : +H] — this IS
        # PyTorch's `.view(batch, -1)` time/batch mixing of the contiguous
        # (T, B, H) lstm_out.  t, b are Python ints -> fully static stores.
        for b in range(B):
            m = t * B + b
            o, r = m // T, m % T
            flat_scr[o:o + 1, r * H:(r + 1) * H] = h[b:b + 1, :]

    # ---- t = 0: h_{-1} = c_{-1} = 0 -> skip h @ W_hh and the f*c term. ----
    g0 = xg[0:B, :]
    sg = jax.nn.sigmoid(g0)                                    # full-width EUP
    tg = jnp.tanh(g0)
    c = sg[:, 0 * H:1 * H] * tg[:, 2 * H:3 * H]                # c_0 = i * g
    h = sg[:, 3 * H:4 * H] * jnp.tanh(c)                       # h_0 = o * tanh(c)
    store_h(0, h)

    # ---- t = 1 .. T-1: full unroll (static slices / stores). ----
    for t in range(1, T):
        gates = xg[t * B:(t + 1) * B, :] + jnp.dot(
            h.astype(jnp.bfloat16), whh, preferred_element_type=jnp.float32)
        sg = jax.nn.sigmoid(gates)                             # (B, 4H) f32
        tg = jnp.tanh(gates)
        i_g = sg[:, 0 * H:1 * H]
        f_g = sg[:, 1 * H:2 * H]
        g_g = tg[:, 2 * H:3 * H]
        o_g = sg[:, 3 * H:4 * H]
        c = f_g * c + i_g * g_g
        h = o_g * jnp.tanh(c)
        store_h(t, h)

    # Fused hidden2gesture: a single (B, T*H) @ (T*H, G) matmul + bias; the
    # hidden states never leave VMEM.
    gest = jnp.dot(flat_scr[...].astype(jnp.bfloat16), wlin_ref[...],
                   preferred_element_type=jnp.float32) + blin_ref[...]
    out_ref[...] = gest.astype(out_ref.dtype)                  # (B, G)


# ---------------------------------------------------------------------------
# One-time parameter preprocessing (outside jit)
# ---------------------------------------------------------------------------
def preprocess_params(params):
    w_ih, w_hh = params["w_ih"], params["w_hh"]
    b_ih, b_hh = params["b_ih"], params["b_hh"]
    w_lin, b_lin = params["w_lin"], params["b_lin"]
    H4 = w_ih.shape[0]
    G = w_lin.shape[0]
    return {
        # bf16 for MXU operands; biases stay f32 (added in f32 in-kernel).
        "wih_t": jnp.transpose(w_ih).astype(jnp.bfloat16),     # (I, 4H)
        "whh_t": jnp.transpose(w_hh).astype(jnp.bfloat16),     # (H, 4H)
        "b_comb": (b_ih + b_hh).reshape(1, H4).astype(jnp.float32),
        "wlin_t": jnp.transpose(w_lin).astype(jnp.bfloat16),   # (T*H, G)
        "blin": b_lin.reshape(1, G).astype(jnp.float32),
    }


# ---------------------------------------------------------------------------
# Forward wrapper
# ---------------------------------------------------------------------------
def jarvis_lstm_forward(x, prepped):
    """x: (T, B, I) float32.  Returns (B, gesture_size) float32."""
    T, B, I = x.shape
    wih_t, whh_t = prepped["wih_t"], prepped["whh_t"]
    b_comb, wlin_t, blin = prepped["b_comb"], prepped["wlin_t"], prepped["blin"]
    H = whh_t.shape[0]
    G = blin.shape[1]
    H4 = 4 * H

    # (T, B, I) -> (T*B, I): row-major flatten of a contiguous buffer (free),
    # cast to bf16 once outside the kernel (halves the input DMA).
    x2d = x.reshape(T * B, I).astype(jnp.bfloat16)

    flops = (2 * T * B * I * H4            # hoisted input projection
             + (T - 1) * 2 * B * H * H4    # recurrence h @ W_hh (t=0 skipped)
             + 2 * B * (T * H) * G)        # fused hidden2gesture
    transcendentals = T * B * (H4 + H4 + H)
    bytes_accessed = (2 * (x2d.size + wih_t.size + whh_t.size + wlin_t.size)
                      + 4 * (b_comb.size + blin.size + B * G))

    vmem = pl.BlockSpec(memory_space=pltpu.MemorySpace.VMEM)
    return pl.pallas_call(
        jarvis_lstm_kernel,
        out_shape=jax.ShapeDtypeStruct((B, G), jnp.float32),
        in_specs=[vmem] * 6,
        out_specs=vmem,
        scratch_shapes=[pltpu.VMEM((B, T * H), jnp.float32)],
        cost_estimate=pl.CostEstimate(
            flops=int(flops),
            transcendentals=int(transcendentals),
            bytes_accessed=int(bytes_accessed)),
    )(x2d, wih_t, whh_t, b_comb, wlin_t, blin)


# ---------------------------------------------------------------------------
# Pure-JAX reference (all-f32, for correctness check)
# ---------------------------------------------------------------------------
def reference_forward(x, params):
    w_ih, w_hh, b_ih, b_hh, w_lin, b_lin = (
        params["w_ih"], params["w_hh"], params["b_ih"], params["b_hh"],
        params["w_lin"], params["b_lin"],
    )
    T, B, I = x.shape
    H = w_hh.shape[1]

    def step(carry, x_t):
        h, c = carry
        gates = x_t @ w_ih.T + b_ih + h @ w_hh.T + b_hh
        i, f, g, o = jnp.split(gates, 4, axis=1)
        i = jax.nn.sigmoid(i)
        f = jax.nn.sigmoid(f)
        g = jnp.tanh(g)
        o = jax.nn.sigmoid(o)
        c = f * c + i * g
        h = o * jnp.tanh(c)
        return (h, c), h

    init = (jnp.zeros((B, H), jnp.float32), jnp.zeros((B, H), jnp.float32))
    _, hs = lax.scan(step, init, x)             # (T, B, H)
    flat = hs.reshape(B, T * H)                 # same raw reshape as .view()
    return flat @ w_lin.T + b_lin


# ---------------------------------------------------------------------------
# Main
# ---------------------------------------------------------------------------
if __name__ == "__main__":
    hidden_dim = 32
    input_size = 16
    gesture_size = 8
    seq_len = 8
    batch = 2

    key = jax.random.PRNGKey(0)
    keys = jax.random.split(key, 8)

    # Deterministic init mimicking PyTorch's uniform(-1/sqrt(H), 1/sqrt(H)).
    bound = 1.0 / (hidden_dim ** 0.5)
    lin_bound = 1.0 / ((hidden_dim * seq_len) ** 0.5)
    params = {
        "w_ih": jax.random.uniform(keys[0], (4 * hidden_dim, input_size),
                                   jnp.float32, -bound, bound),
        "w_hh": jax.random.uniform(keys[1], (4 * hidden_dim, hidden_dim),
                                   jnp.float32, -bound, bound),
        "b_ih": jax.random.uniform(keys[2], (4 * hidden_dim,),
                                   jnp.float32, -bound, bound),
        "b_hh": jax.random.uniform(keys[3], (4 * hidden_dim,),
                                   jnp.float32, -bound, bound),
        "w_lin": jax.random.uniform(keys[4], (gesture_size, hidden_dim * seq_len),
                                    jnp.float32, -lin_bound, lin_bound),
        "b_lin": jax.random.uniform(keys[5], (gesture_size,),
                                    jnp.float32, -lin_bound, lin_bound),
    }

    # Input: (seq_len, batch, input_size), batch_first=False.
    x = jax.random.normal(keys[6], (seq_len, batch, input_size), jnp.float32)

    prepped = preprocess_params(params)              # one-time, outside jit

    out = jax.jit(jarvis_lstm_forward)(x, prepped)
    out = jax.block_until_ready(out)
    assert out.shape == (batch, gesture_size), out.shape

    ref = reference_forward(x, params)
    # Deliberate error budget: matmul operands are bf16 (rel eps ~4e-3), gate /
    # cell math is f32; over T=8 recurrent steps + the output projection the
    # worst-case drift is ~1e-2 absolute, so 3e-2 is a comfortable, intentional
    # bound (an all-f32 path would match to ~1e-5).
    assert jnp.allclose(out, ref, rtol=3e-2, atol=3e-2), (
        "mismatch vs reference", float(jnp.max(jnp.abs(out - ref))))

    print("KERNEL_OK")
</pallas_src>

<mosaic_0001>
module attributes {stable_mosaic.version = 11 : i64} {
  func.func @jarvis_lstm_kernel(%arg0: memref<16x16xbf16, #tpu.memory_space<vmem>>, %arg1: memref<16x128xbf16, #tpu.memory_space<vmem>>, %arg2: memref<32x128xbf16, #tpu.memory_space<vmem>>, %arg3: memref<1x128xf32, #tpu.memory_space<vmem>>, %arg4: memref<256x8xbf16, #tpu.memory_space<vmem>>, %arg5: memref<1x8xf32, #tpu.memory_space<vmem>>, %arg6: memref<2x8xf32, #tpu.memory_space<vmem>>, %arg7: memref<2x256xf32, #tpu.memory_space<vmem>>) attributes {dimension_semantics = [], scalar_prefetch = 0 : i64, scratch_operands = 1 : i64, tpu.core_type = #tpu.core_type<tc>} {
    %c0 = arith.constant 0 : index
    %c0_0 = arith.constant 0 : index
    %0 = vector.load %arg0[%c0, %c0_0] : memref<16x16xbf16, #tpu.memory_space<vmem>>, vector<16x16xbf16>
    %c0_1 = arith.constant 0 : index
    %c0_2 = arith.constant 0 : index
    %1 = vector.load %arg1[%c0_1, %c0_2] : memref<16x128xbf16, #tpu.memory_space<vmem>>, vector<16x128xbf16>
    %cst = arith.constant dense<0.000000e+00> : vector<16x128xf32>
    %2 = tpu.matmul %0, %1, %cst {dimension_numbers = #tpu.dot_dimension_numbers<[1], [0], [0], [1], [0, 0, 1, 1], [], []>} : vector<16x16xbf16>, vector<16x128xbf16>, vector<16x128xf32> -> vector<16x128xf32>
    %c0_3 = arith.constant 0 : index
    %c0_4 = arith.constant 0 : index
    %3 = vector.load %arg3[%c0_3, %c0_4] : memref<1x128xf32, #tpu.memory_space<vmem>>, vector<1x128xf32>
    %4 = vector.broadcast %3 : vector<1x128xf32> to vector<16x128xf32>
    %5 = arith.addf %2, %4 : vector<16x128xf32>
    %c0_5 = arith.constant 0 : index
    %c0_6 = arith.constant 0 : index
    %6 = vector.load %arg2[%c0_5, %c0_6] : memref<32x128xbf16, #tpu.memory_space<vmem>>, vector<32x128xbf16>
    %7 = vector.extract_strided_slice %5 {offsets = [0, 0], sizes = [2, 128], strides = [1, 1]} : vector<16x128xf32> to vector<2x128xf32>
    %8 = arith.negf %7 : vector<2x128xf32>
    %9 = math.exp %8 : vector<2x128xf32>
    %cst_7 = arith.constant 1.000000e+00 : f32
    %10 = vector.broadcast %cst_7 : f32 to vector<2x128xf32>
    %11 = arith.addf %10, %9 : vector<2x128xf32>
    %12 = arith.divf %10, %11 : vector<2x128xf32>
    %13 = math.tanh %7 : vector<2x128xf32>
    %14 = vector.extract_strided_slice %12 {offsets = [0, 0], sizes = [2, 32], strides = [1, 1]} : vector<2x128xf32> to vector<2x32xf32>
    %15 = vector.extract_strided_slice %13 {offsets = [0, 64], sizes = [2, 32], strides = [1, 1]} : vector<2x128xf32> to vector<2x32xf32>
    %16 = arith.mulf %14, %15 : vector<2x32xf32>
    %17 = vector.extract_strided_slice %12 {offsets = [0, 96], sizes = [2, 32], strides = [1, 1]} : vector<2x128xf32> to vector<2x32xf32>
    %18 = math.tanh %16 : vector<2x32xf32>
    %19 = arith.mulf %17, %18 : vector<2x32xf32>
    %20 = vector.extract_strided_slice %19 {offsets = [0, 0], sizes = [1, 32], strides = [1, 1]} : vector<2x32xf32> to vector<1x32xf32>
    %c0_8 = arith.constant 0 : index
    %c0_9 = arith.constant 0 : index
    %21 = vector.load %arg7[%c0_8, %c0_9] : memref<2x256xf32, #tpu.memory_space<vmem>>, vector<1x32xf32>
    tpu.vector_store %arg7[%c0_8, %c0_9], %20 {strides = array<i32>} : memref<2x256xf32, #tpu.memory_space<vmem>>, vector<1x32xf32>,
    %22 = vector.extract_strided_slice %19 {offsets = [1, 0], sizes = [1, 32], strides = [1, 1]} : vector<2x32xf32> to vector<1x32xf32>
    %c0_10 = arith.constant 0 : index
    %c32 = arith.constant 32 : index
    %23 = vector.load %arg7[%c0_10, %c32] : memref<2x256xf32, #tpu.memory_space<vmem>>, vector<1x32xf32>
    tpu.vector_store %arg7[%c0_10, %c32], %22 {strides = array<i32>} : memref<2x256xf32, #tpu.memory_space<vmem>>, vector<1x32xf32>,
    %24 = vector.extract_strided_slice %5 {offsets = [2, 0], sizes = [2, 128], strides = [1, 1]} : vector<16x128xf32> to vector<2x128xf32>
    %25 = arith.truncf %19 : vector<2x32xf32> to vector<2x32xbf16>
    %cst_11 = arith.constant dense<0.000000e+00> : vector<2x128xf32>
    %26 = tpu.matmul %25, %6, %cst_11 {dimension_numbers = #tpu.dot_dimension_numbers<[1], [0], [0], [1], [0, 0, 1, 1], [], []>} : vector<2x32xbf16>, vector<32x128xbf16>, vector<2x128xf32> -> vector<2x128xf32>
    %27 = arith.addf %24, %26 : vector<2x128xf32>
    %28 = arith.negf %27 : vector<2x128xf32>
    %29 = math.exp %28 : vector<2x128xf32>
    %cst_12 = arith.constant 1.000000e+00 : f32
    %30 = vector.broadcast %cst_12 : f32 to vector<2x128xf32>
    %31 = arith.addf %30, %29 : vector<2x128xf32>
    %32 = arith.divf %30, %31 : vector<2x128xf32>
    %33 = math.tanh %27 : vector<2x128xf32>
    %34 = vector.extract_strided_slice %32 {offsets = [0, 0], sizes = [2, 32], strides = [1, 1]} : vector<2x128xf32> to vector<2x32xf32>
    %35 = vector.extract_strided_slice %32 {offsets = [0, 32], sizes = [2, 32], strides = [1, 1]} : vector<2x128xf32> to vector<2x32xf32>
    %36 = vector.extract_strided_slice %33 {offsets = [0, 64], sizes = [2, 32], strides = [1, 1]} : vector<2x128xf32> to vector<2x32xf32>
    %37 = vector.extract_strided_slice %32 {offsets = [0, 96], sizes = [2, 32], strides = [1, 1]} : vector<2x128xf32> to vector<2x32xf32>
    %38 = arith.mulf %35, %16 : vector<2x32xf32>
    %39 = arith.mulf %34, %36 : vector<2x32xf32>
    %40 = arith.addf %38, %39 : vector<2x32xf32>
    %41 = math.tanh %40 : vector<2x32xf32>
    %42 = arith.mulf %37, %41 : vector<2x32xf32>
    %43 = vector.extract_strided_slice %42 {offsets = [0, 0], sizes = [1, 32], strides = [1, 1]} : vector<2x32xf32> to vector<1x32xf32>
    %c0_13 = arith.constant 0 : index
    %c64 = arith.constant 64 : index
    %44 = vector.load %arg7[%c0_13, %c64] : memref<2x256xf32, #tpu.memory_space<vmem>>, vector<1x32xf32>
    tpu.vector_store %arg7[%c0_13, %c64], %43 {strides = array<i32>} : memref<2x256xf32, #tpu.memory_space<vmem>>, vector<1x32xf32>,
    %45 = vector.extract_strided_slice %42 {offsets = [1, 0], sizes = [1, 32], strides = [1, 1]} : vector<2x32xf32> to vector<1x32xf32>
    %c0_14 = arith.constant 0 : index
    %c96 = arith.constant 96 : index
    %46 = vector.load %arg7[%c0_14, %c96] : memref<2x256xf32, #tpu.memory_space<vmem>>, vector<1x32xf32>
    tpu.vector_store %arg7[%c0_14, %c96], %45 {strides = array<i32>} : memref<2x256xf32, #tpu.memory_space<vmem>>, vector<1x32xf32>,
    %47 = vector.extract_strided_slice %5 {offsets = [4, 0], sizes = [2, 128], strides = [1, 1]} : vector<16x128xf32> to vector<2x128xf32>
    %48 = arith.truncf %42 : vector<2x32xf32> to vector<2x32xbf16>
    %cst_15 = arith.constant dense<0.000000e+00> : vector<2x128xf32>
    %49 = tpu.matmul %48, %6, %cst_15 {dimension_numbers = #tpu.dot_dimension_numbers<[1], [0], [0], [1], [0, 0, 1, 1], [], []>} : vector<2x32xbf16>, vector<32x128xbf16>, vector<2x128xf32> -> vector<2x128xf32>
    %50 = arith.addf %47, %49 : vector<2x128xf32>
    %51 = arith.negf %50 : vector<2x128xf32>
    %52 = math.exp %51 : vector<2x128xf32>
    %cst_16 = arith.constant 1.000000e+00 : f32
    %53 = vector.broadcast %cst_16 : f32 to vector<2x128xf32>
    %54 = arith.addf %53, %52 : vector<2x128xf32>
    %55 = arith.divf %53, %54 : vector<2x128xf32>
    %56 = math.tanh %50 : vector<2x128xf32>
    %57 = vector.extract_strided_slice %55 {offsets = [0, 0], sizes = [2, 32], strides = [1, 1]} : vector<2x128xf32> to vector<2x32xf32>
    %58 = vector.extract_strided_slice %55 {offsets = [0, 32], sizes = [2, 32], strides = [1, 1]} : vector<2x128xf32> to vector<2x32xf32>
    %59 = vector.extract_strided_slice %56 {offsets = [0, 64], sizes = [2, 32], strides = [1, 1]} : vector<2x128xf32> to vector<2x32xf32>
    %60 = vector.extract_strided_slice %55 {offsets = [0, 96], sizes = [2, 32], strides = [1, 1]} : vector<2x128xf32> to vector<2x32xf32>
    %61 = arith.mulf %58, %40 : vector<2x32xf32>
    %62 = arith.mulf %57, %59 : vector<2x32xf32>
    %63 = arith.addf %61, %62 : vector<2x32xf32>
    %64 = math.tanh %63 : vector<2x32xf32>
    %65 = arith.mulf %60, %64 : vector<2x32xf32>
    %66 = vector.extract_strided_slice %65 {offsets = [0, 0], sizes = [1, 32], strides = [1, 1]} : vector<2x32xf32> to vector<1x32xf32>
    %c0_17 = arith.constant 0 : index
    %c128 = arith.constant 128 : index
    %67 = vector.load %arg7[%c0_17, %c128] : memref<2x256xf32, #tpu.memory_space<vmem>>, vector<1x32xf32>
    tpu.vector_store %arg7[%c0_17, %c128], %66 {strides = array<i32>} : memref<2x256xf32, #tpu.memory_space<vmem>>, vector<1x32xf32>,
    %68 = vector.extract_strided_slice %65 {offsets = [1, 0], sizes = [1, 32], strides = [1, 1]} : vector<2x32xf32> to vector<1x32xf32>
    %c0_18 = arith.constant 0 : index
    %c160 = arith.constant 160 : index
    %69 = vector.load %arg7[%c0_18, %c160] : memref<2x256xf32, #tpu.memory_space<vmem>>, vector<1x32xf32>
    tpu.vector_store %arg7[%c0_18, %c160], %68 {strides = array<i32>} : memref<2x256xf32, #tpu.memory_space<vmem>>, vector<1x32xf32>,
    %70 = vector.extract_strided_slice %5 {offsets = [6, 0], sizes = [2, 128], strides = [1, 1]} : vector<16x128xf32> to vector<2x128xf32>
    %71 = arith.truncf %65 : vector<2x32xf32> to vector<2x32xbf16>
    %cst_19 = arith.constant dense<0.000000e+00> : vector<2x128xf32>
    %72 = tpu.matmul %71, %6, %cst_19 {dimension_numbers = #tpu.dot_dimension_numbers<[1], [0], [0], [1], [0, 0, 1, 1], [], []>} : vector<2x32xbf16>, vector<32x128xbf16>, vector<2x128xf32> -> vector<2x128xf32>
    %73 = arith.addf %70, %72 : vector<2x128xf32>
    %74 = arith.negf %73 : vector<2x128xf32>
    %75 = math.exp %74 : vector<2x128xf32>
    %cst_20 = arith.constant 1.000000e+00 : f32
    %76 = vector.broadcast %cst_20 : f32 to vector<2x128xf32>
    %77 = arith.addf %76, %75 : vector<2x128xf32>
    %78 = arith.divf %76, %77 : vector<2x128xf32>
    %79 = math.tanh %73 : vector<2x128xf32>
    %80 = vector.extract_strided_slice %78 {offsets = [0, 0], sizes = [2, 32], strides = [1, 1]} : vector<2x128xf32> to vector<2x32xf32>
    %81 = vector.extract_strided_slice %78 {offsets = [0, 32], sizes = [2, 32], strides = [1, 1]} : vector<2x128xf32> to vector<2x32xf32>
    %82 = vector.extract_strided_slice %79 {offsets = [0, 64], sizes = [2, 32], strides = [1, 1]} : vector<2x128xf32> to vector<2x32xf32>
    %83 = vector.extract_strided_slice %78 {offsets = [0, 96], sizes = [2, 32], strides = [1, 1]} : vector<2x128xf32> to vector<2x32xf32>
    %84 = arith.mulf %81, %63 : vector<2x32xf32>
    %85 = arith.mulf %80, %82 : vector<2x32xf32>
    %86 = arith.addf %84, %85 : vector<2x32xf32>
    %87 = math.tanh %86 : vector<2x32xf32>
    %88 = arith.mulf %83, %87 : vector<2x32xf32>
    %89 = vector.extract_strided_slice %88 {offsets = [0, 0], sizes = [1, 32], strides = [1, 1]} : vector<2x32xf32> to vector<1x32xf32>
    %c0_21 = arith.constant 0 : index
    %c192 = arith.constant 192 : index
    %90 = vector.load %arg7[%c0_21, %c192] : memref<2x256xf32, #tpu.memory_space<vmem>>, vector<1x32xf32>
    tpu.vector_store %arg7[%c0_21, %c192], %89 {strides = array<i32>} : memref<2x256xf32, #tpu.memory_space<vmem>>, vector<1x32xf32>,
    %91 = vector.extract_strided_slice %88 {offsets = [1, 0], sizes = [1, 32], strides = [1, 1]} : vector<2x32xf32> to vector<1x32xf32>
    %c0_22 = arith.constant 0 : index
    %c224 = arith.constant 224 : index
    %92 = vector.load %arg7[%c0_22, %c224] : memref<2x256xf32, #tpu.memory_space<vmem>>, vector<1x32xf32>
    tpu.vector_store %arg7[%c0_22, %c224], %91 {strides = array<i32>} : memref<2x256xf32, #tpu.memory_space<vmem>>, vector<1x32xf32>,
    %93 = vector.extract_strided_slice %5 {offsets = [8, 0], sizes = [2, 128], strides = [1, 1]} : vector<16x128xf32> to vector<2x128xf32>
    %94 = arith.truncf %88 : vector<2x32xf32> to vector<2x32xbf16>
    %cst_23 = arith.constant dense<0.000000e+00> : vector<2x128xf32>
    %95 = tpu.matmul %94, %6, %cst_23 {dimension_numbers = #tpu.dot_dimension_numbers<[1], [0], [0], [1], [0, 0, 1, 1], [], []>} : vector<2x32xbf16>, vector<32x128xbf16>, vector<2x128xf32> -> vector<2x128xf32>
    %96 = arith.addf %93, %95 : vector<2x128xf32>
    %97 = arith.negf %96 : vector<2x128xf32>
    %98 = math.exp %97 : vector<2x128xf32>
    %cst_24 = arith.constant 1.000000e+00 : f32
    %99 = vector.broadcast %cst_24 : f32 to vector<2x128xf32>
    %100 = arith.addf %99, %98 : vector<2x128xf32>
    %101 = arith.divf %99, %100 : vector<2x128xf32>
    %102 = math.tanh %96 : vector<2x128xf32>
    %103 = vector.extract_strided_slice %101 {offsets = [0, 0], sizes = [2, 32], strides = [1, 1]} : vector<2x128xf32> to vector<2x32xf32>
    %104 = vector.extract_strided_slice %101 {offsets = [0, 32], sizes = [2, 32], strides = [1, 1]} : vector<2x128xf32> to vector<2x32xf32>
    %105 = vector.extract_strided_slice %102 {offsets = [0, 64], sizes = [2, 32], strides = [1, 1]} : vector<2x128xf32> to vector<2x32xf32>
    %106 = vector.extract_strided_slice %101 {offsets = [0, 96], sizes = [2, 32], strides = [1, 1]} : vector<2x128xf32> to vector<2x32xf32>
    %107 = arith.mulf %104, %86 : vector<2x32xf32>
    %108 = arith.mulf %103, %105 : vector<2x32xf32>
    %109 = arith.addf %107, %108 : vector<2x32xf32>
    %110 = math.tanh %109 : vector<2x32xf32>
    %111 = arith.mulf %106, %110 : vector<2x32xf32>
    %112 = vector.extract_strided_slice %111 {offsets = [0, 0], sizes = [1, 32], strides = [1, 1]} : vector<2x32xf32> to vector<1x32xf32>
    %c1 = arith.constant 1 : index
    %c0_25 = arith.constant 0 : index
    %113 = vector.load %arg7[%c1, %c0_25] : memref<2x256xf32, #tpu.memory_space<vmem>>, vector<1x32xf32>
    tpu.vector_store %arg7[%c1, %c0_25], %112 {strides = array<i32>} : memref<2x256xf32, #tpu.memory_space<vmem>>, vector<1x32xf32>,
    %114 = vector.extract_strided_slice %111 {offsets = [1, 0], sizes = [1, 32], strides = [1, 1]} : vector<2x32xf32> to vector<1x32xf32>
    %c1_26 = arith.constant 1 : index
    %c32_27 = arith.constant 32 : index
    %115 = vector.load %arg7[%c1_26, %c32_27] : memref<2x256xf32, #tpu.memory_space<vmem>>, vector<1x32xf32>
    tpu.vector_store %arg7[%c1_26, %c32_27], %114 {strides = array<i32>} : memref<2x256xf32, #tpu.memory_space<vmem>>, vector<1x32xf32>,
    %116 = vector.extract_strided_slice %5 {offsets = [10, 0], sizes = [2, 128], strides = [1, 1]} : vector<16x128xf32> to vector<2x128xf32>
    %117 = arith.truncf %111 : vector<2x32xf32> to vector<2x32xbf16>
    %cst_28 = arith.constant dense<0.000000e+00> : vector<2x128xf32>
    %118 = tpu.matmul %117, %6, %cst_28 {dimension_numbers = #tpu.dot_dimension_numbers<[1], [0], [0], [1], [0, 0, 1, 1], [], []>} : vector<2x32xbf16>, vector<32x128xbf16>, vector<2x128xf32> -> vector<2x128xf32>
    %119 = arith.addf %116, %118 : vector<2x128xf32>
    %120 = arith.negf %119 : vector<2x128xf32>
    %121 = math.exp %120 : vector<2x128xf32>
    %cst_29 = arith.constant 1.000000e+00 : f32
    %122 = vector.broadcast %cst_29 : f32 to vector<2x128xf32>
    %123 = arith.addf %122, %121 : vector<2x128xf32>
    %124 = arith.divf %122, %123 : vector<2x128xf32>
    %125 = math.tanh %119 : vector<2x128xf32>
    %126 = vector.extract_strided_slice %124 {offsets = [0, 0], sizes = [2, 32], strides = [1, 1]} : vector<2x128xf32> to vector<2x32xf32>
    %127 = vector.extract_strided_slice %124 {offsets = [0, 32], sizes = [2, 32], strides = [1, 1]} : vector<2x128xf32> to vector<2x32xf32>
    %128 = vector.extract_strided_slice %125 {offsets = [0, 64], sizes = [2, 32], strides = [1, 1]} : vector<2x128xf32> to vector<2x32xf32>
    %129 = vector.extract_strided_slice %124 {offsets = [0, 96], sizes = [2, 32], strides = [1, 1]} : vector<2x128xf32> to vector<2x32xf32>
    %130 = arith.mulf %127, %109 : vector<2x32xf32>
    %131 = arith.mulf %126, %128 : vector<2x32xf32>
    %132 = arith.addf %130, %131 : vector<2x32xf32>
    %133 = math.tanh %132 : vector<2x32xf32>
    %134 = arith.mulf %129, %133 : vector<2x32xf32>
    %135 = vector.extract_strided_slice %134 {offsets = [0, 0], sizes = [1, 32], strides = [1, 1]} : vector<2x32xf32> to vector<1x32xf32>
    %c1_30 = arith.constant 1 : index
    %c64_31 = arith.constant 64 : index
    %136 = vector.load %arg7[%c1_30, %c64_31] : memref<2x256xf32, #tpu.memory_space<vmem>>, vector<1x32xf32>
    tpu.vector_store %arg7[%c1_30, %c64_31], %135 {strides = array<i32>} : memref<2x256xf32, #tpu.memory_space<vmem>>, vector<1x32xf32>,
    %137 = vector.extract_strided_slice %134 {offsets = [1, 0], sizes = [1, 32], strides = [1, 1]} : vector<2x32xf32> to vector<1x32xf32>
    %c1_32 = arith.constant 1 : index
    %c96_33 = arith.constant 96 : index
    %138 = vector.load %arg7[%c1_32, %c96_33] : memref<2x256xf32, #tpu.memory_space<vmem>>, vector<1x32xf32>
    tpu.vector_store %arg7[%c1_32, %c96_33], %137 {strides = array<i32>} : memref<2x256xf32, #tpu.memory_space<vmem>>, vector<1x32xf32>,
    %139 = vector.extract_strided_slice %5 {offsets = [12, 0], sizes = [2, 128], strides = [1, 1]} : vector<16x128xf32> to vector<2x128xf32>
    %140 = arith.truncf %134 : vector<2x32xf32> to vector<2x32xbf16>
    %cst_34 = arith.constant dense<0.000000e+00> : vector<2x128xf32>
    %141 = tpu.matmul %140, %6, %cst_34 {dimension_numbers = #tpu.dot_dimension_numbers<[1], [0], [0], [1], [0, 0, 1, 1], [], []>} : vector<2x32xbf16>, vector<32x128xbf16>, vector<2x128xf32> -> vector<2x128xf32>
    %142 = arith.addf %139, %141 : vector<2x128xf32>
    %143 = arith.negf %142 : vector<2x128xf32>
    %144 = math.exp %143 : vector<2x128xf32>
    %cst_35 = arith.constant 1.000000e+00 : f32
    %145 = vector.broadcast %cst_35 : f32 to vector<2x128xf32>
    %146 = arith.addf %145, %144 : vector<2x128xf32>
    %147 = arith.divf %145, %146 : vector<2x128xf32>
    %148 = math.tanh %142 : vector<2x128xf32>
    %149 = vector.extract_strided_slice %147 {offsets = [0, 0], sizes = [2, 32], strides = [1, 1]} : vector<2x128xf32> to vector<2x32xf32>
    %150 = vector.extract_strided_slice %147 {offsets = [0, 32], sizes = [2, 32], strides = [1, 1]} : vector<2x128xf32> to vector<2x32xf32>
    %151 = vector.extract_strided_slice %148 {offsets = [0, 64], sizes = [2, 32], strides = [1, 1]} : vector<2x128xf32> to vector<2x32xf32>
    %152 = vector.extract_strided_slice %147 {offsets = [0, 96], sizes = [2, 32], strides = [1, 1]} : vector<2x128xf32> to vector<2x32xf32>
    %153 = arith.mulf %150, %132 : vector<2x32xf32>
    %154 = arith.mulf %149, %151 : vector<2x32xf32>
    %155 = arith.addf %153, %154 : vector<2x32xf32>
    %156 = math.tanh %155 : vector<2x32xf32>
    %157 = arith.mulf %152, %156 : vector<2x32xf32>
    %158 = vector.extract_strided_slice %157 {offsets = [0, 0], sizes = [1, 32], strides = [1, 1]} : vector<2x32xf32> to vector<1x32xf32>
    %c1_36 = arith.constant 1 : index
    %c128_37 = arith.constant 128 : index
    %159 = vector.load %arg7[%c1_36, %c128_37] : memref<2x256xf32, #tpu.memory_space<vmem>>, vector<1x32xf32>
    tpu.vector_store %arg7[%c1_36, %c128_37], %158 {strides = array<i32>} : memref<2x256xf32, #tpu.memory_space<vmem>>, vector<1x32xf32>,
    %160 = vector.extract_strided_slice %157 {offsets = [1, 0], sizes = [1, 32], strides = [1, 1]} : vector<2x32xf32> to vector<1x32xf32>
    %c1_38 = arith.constant 1 : index
    %c160_39 = arith.constant 160 : index
    %161 = vector.load %arg7[%c1_38, %c160_39] : memref<2x256xf32, #tpu.memory_space<vmem>>, vector<1x32xf32>
    tpu.vector_store %arg7[%c1_38, %c160_39], %160 {strides = array<i32>} : memref<2x256xf32, #tpu.memory_space<vmem>>, vector<1x32xf32>,
    %162 = vector.extract_strided_slice %5 {offsets = [14, 0], sizes = [2, 128], strides = [1, 1]} : vector<16x128xf32> to vector<2x128xf32>
    %163 = arith.truncf %157 : vector<2x32xf32> to vector<2x32xbf16>
    %cst_40 = arith.constant dense<0.000000e+00> : vector<2x128xf32>
    %164 = tpu.matmul %163, %6, %cst_40 {dimension_numbers = #tpu.dot_dimension_numbers<[1], [0], [0], [1], [0, 0, 1, 1], [], []>} : vector<2x32xbf16>, vector<32x128xbf16>, vector<2x128xf32> -> vector<2x128xf32>
    %165 = arith.addf %162, %164 : vector<2x128xf32>
    %166 = arith.negf %165 : vector<2x128xf32>
    %167 = math.exp %166 : vector<2x128xf32>
    %cst_41 = arith.constant 1.000000e+00 : f32
    %168 = vector.broadcast %cst_41 : f32 to vector<2x128xf32>
    %169 = arith.addf %168, %167 : vector<2x128xf32>
    %170 = arith.divf %168, %169 : vector<2x128xf32>
    %171 = math.tanh %165 : vector<2x128xf32>
    %172 = vector.extract_strided_slice %170 {offsets = [0, 0], sizes = [2, 32], strides = [1, 1]} : vector<2x128xf32> to vector<2x32xf32>
    %173 = vector.extract_strided_slice %170 {offsets = [0, 32], sizes = [2, 32], strides = [1, 1]} : vector<2x128xf32> to vector<2x32xf32>
    %174 = vector.extract_strided_slice %171 {offsets = [0, 64], sizes = [2, 32], strides = [1, 1]} : vector<2x128xf32> to vector<2x32xf32>
    %175 = vector.extract_strided_slice %170 {offsets = [0, 96], sizes = [2, 32], strides = [1, 1]} : vector<2x128xf32> to vector<2x32xf32>
    %176 = arith.mulf %173, %155 : vector<2x32xf32>
    %177 = arith.mulf %172, %174 : vector<2x32xf32>
    %178 = arith.addf %176, %177 : vector<2x32xf32>
    %179 = math.tanh %178 : vector<2x32xf32>
    %180 = arith.mulf %175, %179 : vector<2x32xf32>
    %181 = vector.extract_strided_slice %180 {offsets = [0, 0], sizes = [1, 32], strides = [1, 1]} : vector<2x32xf32> to vector<1x32xf32>
    %c1_42 = arith.constant 1 : index
    %c192_43 = arith.constant 192 : index
    %182 = vector.load %arg7[%c1_42, %c192_43] : memref<2x256xf32, #tpu.memory_space<vmem>>, vector<1x32xf32>
    tpu.vector_store %arg7[%c1_42, %c192_43], %181 {strides = array<i32>} : memref<2x256xf32, #tpu.memory_space<vmem>>, vector<1x32xf32>,
    %183 = vector.extract_strided_slice %180 {offsets = [1, 0], sizes = [1, 32], strides = [1, 1]} : vector<2x32xf32> to vector<1x32xf32>
    %c1_44 = arith.constant 1 : index
    %c224_45 = arith.constant 224 : index
    %184 = vector.load %arg7[%c1_44, %c224_45] : memref<2x256xf32, #tpu.memory_space<vmem>>, vector<1x32xf32>
    tpu.vector_store %arg7[%c1_44, %c224_45], %183 {strides = array<i32>} : memref<2x256xf32, #tpu.memory_space<vmem>>, vector<1x32xf32>,
    %c0_46 = arith.constant 0 : index
    %c0_47 = arith.constant 0 : index
    %185 = vector.load %arg7[%c0_46, %c0_47] : memref<2x256xf32, #tpu.memory_space<vmem>>, vector<2x256xf32>
    %186 = arith.truncf %185 : vector<2x256xf32> to vector<2x256xbf16>
    %c0_48 = arith.constant 0 : index
    %c0_49 = arith.constant 0 : index
    %187 = vector.load %arg4[%c0_48, %c0_49] : memref<256x8xbf16, #tpu.memory_space<vmem>>, vector<256x8xbf16>
    %cst_50 = arith.constant dense<0.000000e+00> : vector<2x8xf32>
    %188 = tpu.matmul %186, %187, %cst_50 {dimension_numbers = #tpu.dot_dimension_numbers<[1], [0], [0], [1], [0, 0, 1, 1], [], []>} : vector<2x256xbf16>, vector<256x8xbf16>, vector<2x8xf32> -> vector<2x8xf32>
    %c0_51 = arith.constant 0 : index
    %c0_52 = arith.constant 0 : index
    %189 = vector.load %arg5[%c0_51, %c0_52] : memref<1x8xf32, #tpu.memory_space<vmem>>, vector<1x8xf32>
    %190 = vector.broadcast %189 : vector<1x8xf32> to vector<2x8xf32>
    %191 = arith.addf %188, %190 : vector<2x8xf32>
    %c0_53 = arith.constant 0 : index
    %c0_54 = arith.constant 0 : index
    %192 = vector.load %arg6[%c0_53, %c0_54] : memref<2x8xf32, #tpu.memory_space<vmem>>, vector<2x8xf32>
    tpu.vector_store %arg6[%c0_53, %c0_54], %191 {strides = array<i32>} : memref<2x8xf32, #tpu.memory_space<vmem>>, vector<2x8xf32>,
    return
  }
}

</mosaic_0001>

<llo_original>
// kernel: jarvis_lstm_forward.1
$region0: #{jarvis_lstm_forward.1}
  #allocation0 [shape = 'u32[]', space=smem, size = 0x4, offset = 0x4, fixed_abs, tag = 'smem constant byte address 0x4 - core index']
  #allocation1 [shape = 'u32[144,128]{1,0:T(1,128)}', space=vmem, size = 0x12000, scoped, tag = 'internal scratch']
  #allocation2 [shape = 'f32[2,256]{1,0:T(2,128)}', space=vmem, size = 0x800, scoped, tag = 'scratch operand']
  %s0 = inlined_call_operand.vmem [shape: bf16[16,16], index: 0, kind: input, shape index: {}]
  %s1 = inlined_call_operand.vmem [shape: bf16[16,128], index: 1, kind: input, shape index: {}]
  %s2 = inlined_call_operand.vmem [shape: bf16[32,128], index: 2, kind: input, shape index: {}]
  %s3 = inlined_call_operand.vmem [shape: f32[1,128], index: 3, kind: input, shape index: {}]
  %s4 = inlined_call_operand.vmem [shape: bf16[256,8], index: 4, kind: input, shape index: {}]
  %s5 = inlined_call_operand.vmem [shape: f32[1,8], index: 5, kind: input, shape index: {}]
  %s6 = inlined_call_operand.hbm [shape: f32[2,8], index: 6, kind: output, shape index: {}]
  %s7 = sld [smem:[#allocation0]]
  $region34: #{jarvis_lstm_forward.1} parent=0
    _
  %s9 = ssub.s32 1, %s7
  %s10 = scalar_select 0, %s9, %s7
  $region1: #{jarvis_lstm_forward.1} parent=0
    #allocation3 [shape = 'u8[1024]{0}', space=vmem, size = 0x400, scoped, tag = 'output window, operand 0, single buffered']
    #allocation4 [shape = 's32[1]{0}', space=sflag, size = 0x4, scoped, tag = 'scoped memory for jarvis_lstm_forward.1']
    %11 = vsyncpa [#allocation4], 0
    // Predicated region
    $region2: #{jarvis_lstm_forward.1} parent=1 // pred_check
      _
    $region3: #{jarvis_lstm_forward.1} parent=1 // pred_check_branch
      %13 = sbr.rel (0) target = $region5
    $region4: #{jarvis_lstm_forward.1} parent=1 // pred_region
      _
    $region5: #{jarvis_lstm_forward.1} parent=1 // pred_fallthru
      _
    // Predicated region
    $region6: #{jarvis_lstm_forward.1} parent=1 // pred_check
      _
    $region7: #{jarvis_lstm_forward.1} parent=1 // pred_check_branch
      %15 = sbr.rel (0) target = $region9
    $region8: #{jarvis_lstm_forward.1} parent=1 // pred_region
      _
    $region9: #{jarvis_lstm_forward.1} parent=1 // pred_fallthru
      _
    // Predicated region
    $region10: #{jarvis_lstm_forward.1} parent=1 // pred_check
      _
    $region11: #{jarvis_lstm_forward.1} parent=1 // pred_check_branch
      %17 = sbr.rel (0) target = $region13
    $region12: #{jarvis_lstm_forward.1} parent=1 // pred_region
      _
    $region13: #{jarvis_lstm_forward.1} parent=1 // pred_fallthru
      _
    // Predicated region
    $region14: #{jarvis_lstm_forward.1} parent=1 // pred_check
      _
    $region15: #{jarvis_lstm_forward.1} parent=1 // pred_check_branch
      %19 = sbr.rel (0) target = $region17
    $region16: #{jarvis_lstm_forward.1} parent=1 // pred_region
      _
    $region17: #{jarvis_lstm_forward.1} parent=1 // pred_fallthru
      _
    // Predicated region
    $region18: #{jarvis_lstm_forward.1} parent=1 // pred_check
      _
    $region19: #{jarvis_lstm_forward.1} parent=1 // pred_check_branch
      %21 = sbr.rel (0) target = $region21
    $region20: #{jarvis_lstm_forward.1} parent=1 // pred_region
      _
    $region21: #{jarvis_lstm_forward.1} parent=1 // pred_fallthru
      _
    // Predicated region
    $region22: #{jarvis_lstm_forward.1} parent=1 // pred_check
      _
    $region23: #{jarvis_lstm_forward.1} parent=1 // pred_check_branch
      %23 = sbr.rel (0) target = $region25
    $region24: #{jarvis_lstm_forward.1} parent=1 // pred_region
      _
    $region25: #{jarvis_lstm_forward.1} parent=1 // pred_fallthru
      _
    %v25 = vld [vmem:[%s0] sm:$0xf]
    %v26 = vld [vmem:[%s0 + $0x4] sm:$0xf]
    %v27 = vld [vmem:[%s1] sm:$0xf]
    %v28 = vld [vmem:[%s1 + $0x4] sm:$0xf]
    %v29 = vld [vmem:[%s3] sm:$0x1]
    %v31 = vlaneseq
    %v32 = vshrl.u32 %v31, 7
    %v33 = vsub.s32 0, %v32
    %v34 = vrot.slane %v29, %v33
    %v38 = vunpack.c.l.b16 %v25
    %v39 = vunpack.c.l.b16 %v26
    %v40 = vpack.c.b16 %v39, %v38
    %v43 = vunpack.c.l.b16 %v27
    %v44 = vunpack.c.l.b16 %v28
    %v45 = vpack.c.b16 %v44, %v43
    %vm47 = vcmask 130048
    %v49 = vsel %vm47, %v40, 0
    %51 = vmatprep.subr.bf16.mxu0 0
    %52 = vmatpush1.bf16.msra.mxu0 %v45
    %53 = vmatprep.subr.bf16.mxu0 0
    %54 = vmatpush1.bf16.msra.mxu0 0
    %55 = vmatprep.subr.bf16.mxu0 0
    %56 = vmatpush1.bf16.msra.mxu0 0
    %57 = vmatprep.subr.bf16.mxu0 0
    %58 = vmatpush1.bf16.msra.mxu0 0
    %59 = vmatprep.subr.bf16.mxu0 0
    %60 = vmatpush1.bf16.msra.mxu0 0
    %61 = vmatprep.subr.bf16.mxu0 0
    %62 = vmatpush1.bf16.msra.mxu0 0
    %63 = vmatprep.subr.bf16.mxu0 0
    %64 = vmatpush1.bf16.msra.mxu0 0
    %65 = vmatprep.subr.bf16.mxu0 0
    %66 = vmatpush1.bf16.msra.mxu0 0
    %67 = vmatprep.subr.bf16.mxu0 0
    %68 = vmatpush1.bf16.msra.mxu0 0
    %69 = vmatprep.subr.bf16.mxu0 0
    %70 = vmatpush1.bf16.msra.mxu0 0
    %71 = vmatprep.subr.bf16.mxu0 0
    %72 = vmatpush1.bf16.msra.mxu0 0
    %73 = vmatprep.subr.bf16.mxu0 0
    %74 = vmatpush1.bf16.msra.mxu0 0
    %75 = vmatprep.subr.bf16.mxu0 0
    %76 = vmatpush1.bf16.msra.mxu0 0
    %77 = vmatprep.subr.bf16.mxu0 0
    %78 = vmatpush1.bf16.msra.mxu0 0
    %79 = vmatprep.subr.bf16.mxu0 0
    %80 = vmatpush1.bf16.msra.mxu0 0
    %81 = vmatprep.subr.bf16.mxu0 0
    %82 = vmatpush1.bf16.msra.mxu0 0
    %83 = vmatprep.mubr.bf16.mxu0 0
    %84 = vmatmul.mubr.bf16.gmra.mrb[0].mxu0 %v49
    %v85 = vpop.f32.mrb[0].mxu0
    %v86 = vadd.f32 %v34, %v85
    %v87 = vpop.f32.mrb[0].mxu0
    %v88 = vpop.f32.mrb[0].mxu0
    %v89 = vadd.f32 %v34, %v88
    %v90 = vpop.f32.mrb[0].mxu0
    %91 = vdwg.mxu0
    %v92 = vld [vmem:[%s2] sm:$0xf]
    %v93 = vld [vmem:[%s2 + $0x4] sm:$0xf]
    %v94 = vld [vmem:[%s2 + $0x8] sm:$0xf]
    %v95 = vld [vmem:[%s2 + $0xc] sm:$0xf]
    %v96 = vxor.u32 %v86, 2147483648
    %v97 = vmul.f32 %v96, 1.442695
    %v98 = vpow.pop %v97
    %v99 = vadd.f32 %v98, 1.0
    %v100 = vrcp.pop %v99
    %v101 = vmul.f32 1.0, %v100
    %v102 = vtanh.pop %v86
    %104 = vrot.lane.b32.xlu0 %v102, 64
    %v105 = vpop.permute.xlu0 %104
    %v107 = vmul.f32 %v101, %v105
    %v108 = vtanh.pop %v107
    %110 = vrot.lane.b32.xlu0 %v108, 96
    %v111 = vpop.permute.xlu0 %110
    %v113 = vmul.f32 %v101, %v111
    %v116 = vunpack.c.l.s4 1983009808
    %v117 = vunpack.c.0.s8 %v116
    %v118 = vlaneseq
    %v119 = vshrl.u32 %v118, 7
    %v120 = vsub.s32 %v117, %v119
    %v121 = vrot.slane %v113, %v120
    %122 = vrot.lane.b32.xlu0 %v121, 32
    %v123 = vpop.permute.xlu0 %122
    %vm125 = vcmask 253952
    %126 = vst.msk [vmem:[#allocation2] sm:$0x1] %vm125, %v123
    %v127 = vrot.slane %v121, 7
    %v128 = vrot.slane %v127, 2
    %129 = vrot.lane.b32.xlu0 %v128, 64
    %v130 = vpop.permute.xlu0 %129
    %vm132 = vcmask 516352
    %133 = vst.msk [vmem:[#allocation2] sm:$0x1] %vm132, %v130
    %v134 = vpack.c.bf16 %v113, %v113
    %136 = vrot.lane.b32.xlu0 %v134, 32
    %v137 = vpop.permute.xlu0 %136
    %v142 = vunpack.c.l.b16 %v92
    %v143 = vunpack.c.l.b16 %v93
    %v144 = vunpack.c.l.b16 %v94
    %v145 = vunpack.c.l.b16 %v95
    %v146 = vpack.c.b16 %v143, %v142
    %v147 = vpack.c.b16 %v145, %v144
    %vm150 = vcmask 261120
    %v152 = vsel %vm150, %v137, 0
    %154 = vmatprep.subr.bf16.mxu0 0
    %155 = vmatpush1.bf16.msra.mxu0 %v146
    %156 = vmatprep.subr.bf16.mxu0 0
    %157 = vmatpush1.bf16.msra.mxu0 %v147
    %158 = vmatprep.subr.bf16.mxu0 0
    %159 = vmatpush1.bf16.msra.mxu0 0
    %160 = vmatprep.subr.bf16.mxu0 0
    %161 = vmatpush1.bf16.msra.mxu0 0
    %162 = vmatprep.subr.bf16.mxu0 0
    %163 = vmatpush1.bf16.msra.mxu0 0
    %164 = vmatprep.subr.bf16.mxu0 0
    %165 = vmatpush1.bf16.msra.mxu0 0
    %166 = vmatprep.subr.bf16.mxu0 0
    %167 = vmatpush1.bf16.msra.mxu0 0
    %168 = vmatprep.subr.bf16.mxu0 0
    %169 = vmatpush1.bf16.msra.mxu0 0
    %170 = vmatprep.subr.bf16.mxu0 0
    %171 = vmatpush1.bf16.msra.mxu0 0
    %172 = vmatprep.subr.bf16.mxu0 0
    %173 = vmatpush1.bf16.msra.mxu0 0
    %174 = vmatprep.subr.bf16.mxu0 0
    %175 = vmatpush1.bf16.msra.mxu0 0
    %176 = vmatprep.subr.bf16.mxu0 0
    %177 = vmatpush1.bf16.msra.mxu0 0
    %178 = vmatprep.subr.bf16.mxu0 0
    %179 = vmatpush1.bf16.msra.mxu0 0
    %180 = vmatprep.subr.bf16.mxu0 0
    %181 = vmatpush1.bf16.msra.mxu0 0
    %182 = vmatprep.subr.bf16.mxu0 0
    %183 = vmatpush1.bf16.msra.mxu0 0
    %184 = vmatprep.subr.bf16.mxu0 0
    %185 = vmatpush1.bf16.msra.mxu0 0
    %186 = vmatprep.mubr.bf16.mxu0 0
    %187 = vmatmul.mubr.bf16.gmra.mrb[0].mxu0 %v152
    %v188 = vpop.f32.mrb[0].mxu0
    %v189 = vadd.f32 0.0, %v188
    %v190 = vpop.f32.mrb[0].mxu0
    %v191 = vpop.f32.mrb[0].mxu0
    %v192 = vpop.f32.mrb[0].mxu0
    %193 = vdwg.mxu0
    %v195 = vrot.slane %v189, 6
    %v197 = vadd.f32 %v86, %v195
    %v198 = vxor.u32 %v197, 2147483648
    %v199 = vmul.f32 %v198, 1.442695
    %v200 = vpow.pop %v199
    %v201 = vadd.f32 %v200, 1.0
    %v202 = vrcp.pop %v201
    %v203 = vmul.f32 1.0, %v202
    %v204 = vtanh.pop %v197
    %v206 = vrot.slane %v107, 6
    %207 = vrot.lane.b32.xlu0 %v206, 32
    %v208 = vpop.permute.xlu0 %207
    %v210 = vmul.f32 %v203, %v208
    %212 = vrot.lane.b32.xlu0 %v204, 64
    %v213 = vpop.permute.xlu0 %212
    %v215 = vmul.f32 %v203, %v213
    %217 = vrot.lane.b32.xlu0 %v215, 32
    %v218 = vpop.permute.xlu0 %217
    %v220 = vadd.f32 %v210, %v218
    %v221 = vtanh.pop %v220
    %223 = vrot.lane.b32.xlu0 %v221, 64
    %v224 = vpop.permute.xlu0 %223
    %v226 = vmul.f32 %v203, %v224
    %v229 = vunpack.c.l.s4 1983009808
    %v230 = vunpack.c.0.s8 %v229
    %v231 = vlaneseq
    %v232 = vshrl.u32 %v231, 7
    %v233 = vsub.s32 %v230, %v232
    %v234 = vrot.slane %v226, %v233
    %v235 = vcombine.high %v234, %v234
    %236 = vrot.lane.b32.xlu0 %v235, 96
    %v237 = vpop.permute.xlu0 %236
    %vm239 = vcmask 778752
    %240 = vst.msk [vmem:[#allocation2] sm:$0x1] %vm239, %v237
    %v241 = vrot.slane %v235, 7
    %v242 = vrot.slane %v241, 2
    %vm244 = vcmask 1041152
    %245 = vst.msk [vmem:[#allocation2] sm:$0x1] %vm244, %v242
    %v246 = vpack.c.bf16 %v226, %v226
    %v248 = vrot.slane %v246, 1
    %249 = vrot.lane.b32.xlu0 %v248, 32
    %v250 = vpop.permute.xlu0 %249
    %v252 = vsel %vm150, %v250, 0
    %254 = vmatprep.subr.bf16.mxu0 0
    %255 = vmatpush1.bf16.msra.mxu0 %v146
    %256 = vmatprep.subr.bf16.mxu0 0
    %257 = vmatpush1.bf16.msra.mxu0 %v147
    %258 = vmatprep.subr.bf16.mxu0 0
    %259 = vmatpush1.bf16.msra.mxu0 0
    %260 = vmatprep.subr.bf16.mxu0 0
    %261 = vmatpush1.bf16.msra.mxu0 0
    %262 = vmatprep.subr.bf16.mxu0 0
    %263 = vmatpush1.bf16.msra.mxu0 0
    %264 = vmatprep.subr.bf16.mxu0 0
    %265 = vmatpush1.bf16.msra.mxu0 0
    %266 = vmatprep.subr.bf16.mxu0 0
    %267 = vmatpush1.bf16.msra.mxu0 0
    %268 = vmatprep.subr.bf16.mxu0 0
    %269 = vmatpush1.bf16.msra.mxu0 0
    %270 = vmatprep.subr.bf16.mxu0 0
    %271 = vmatpush1.bf16.msra.mxu0 0
    %272 = vmatprep.subr.bf16.mxu0 0
    %273 = vmatpush1.bf16.msra.mxu0 0
    %274 = vmatprep.subr.bf16.mxu0 0
    %275 = vmatpush1.bf16.msra.mxu0 0
    %276 = vmatprep.subr.bf16.mxu0 0
    %277 = vmatpush1.bf16.msra.mxu0 0
    %278 = vmatprep.subr.bf16.mxu0 0
    %279 = vmatpush1.bf16.msra.mxu0 0
    %280 = vmatprep.subr.bf16.mxu0 0
    %281 = vmatpush1.bf16.msra.mxu0 0
    %282 = vmatprep.subr.bf16.mxu0 0
    %283 = vmatpush1.bf16.msra.mxu0 0
    %284 = vmatprep.subr.bf16.mxu0 0
    %285 = vmatpush1.bf16.msra.mxu0 0
    %286 = vmatprep.mubr.bf16.mxu0 0
    %287 = vmatmul.mubr.bf16.gmra.mrb[0].mxu0 %v252
    %v288 = vpop.f32.mrb[0].mxu0
    %v289 = vadd.f32 0.0, %v288
    %v290 = vpop.f32.mrb[0].mxu0
    %v291 = vpop.f32.mrb[0].mxu0
    %v292 = vpop.f32.mrb[0].mxu0
    %293 = vdwg.mxu0
    %v295 = vrot.slane %v289, 4
    %v297 = vadd.f32 %v86, %v295
    %v298 = vxor.u32 %v297, 2147483648
    %v299 = vmul.f32 %v298, 1.442695
    %v300 = vpow.pop %v299
    %v301 = vadd.f32 %v300, 1.0
    %v302 = vrcp.pop %v301
    %v303 = vmul.f32 1.0, %v302
    %v304 = vtanh.pop %v297
    %v306 = vrot.slane %v220, 6
    %v308 = vmul.f32 %v303, %v306
    %310 = vrot.lane.b32.xlu0 %v304, 64
    %v311 = vpop.permute.xlu0 %310
    %v313 = vmul.f32 %v303, %v311
    %315 = vrot.lane.b32.xlu0 %v313, 32
    %v316 = vpop.permute.xlu0 %315
    %v318 = vadd.f32 %v308, %v316
    %v319 = vtanh.pop %v318
    %321 = vrot.lane.b32.xlu0 %v319, 64
    %v322 = vpop.permute.xlu0 %321
    %v324 = vmul.f32 %v303, %v322
    %v326 = vcombine.high %v324, %v324
    %v328 = vunpack.c.l.s4 1983009808
    %v329 = vunpack.c.0.s8 %v328
    %v330 = vlaneseq
    %v331 = vshrl.u32 %v330, 7
    %v332 = vsub.s32 %v329, %v331
    %v333 = vrot.slane %v326, %v332
    %334 = vrot.lane.b32.xlu0 %v333, 32
    %v335 = vpop.permute.xlu0 %334
    %337 = vst.msk [vmem:[#allocation2 + $0x2] sm:$0x1] %vm125, %v335
    %v338 = vrot.slane %v333, 7
    %v339 = vrot.slane %v338, 2
    %340 = vrot.lane.b32.xlu0 %v339, 64
    %v341 = vpop.permute.xlu0 %340
    %343 = vst.msk [vmem:[#allocation2 + $0x2] sm:$0x1] %vm132, %v341
    %v344 = vpack.c.bf16 %v324, %v324
    %v346 = vrot.slane %v344, 2
    %347 = vrot.lane.b32.xlu0 %v346, 32
    %v348 = vpop.permute.xlu0 %347
    %v350 = vsel %vm150, %v348, 0
    %352 = vmatprep.subr.bf16.mxu0 0
    %353 = vmatpush1.bf16.msra.mxu0 %v146
    %354 = vmatprep.subr.bf16.mxu0 0
    %355 = vmatpush1.bf16.msra.mxu0 %v147
    %356 = vmatprep.subr.bf16.mxu0 0
    %357 = vmatpush1.bf16.msra.mxu0 0
    %358 = vmatprep.subr.bf16.mxu0 0
    %359 = vmatpush1.bf16.msra.mxu0 0
    %360 = vmatprep.subr.bf16.mxu0 0
    %361 = vmatpush1.bf16.msra.mxu0 0
    %362 = vmatprep.subr.bf16.mxu0 0
    %363 = vmatpush1.bf16.msra.mxu0 0
    %364 = vmatprep.subr.bf16.mxu0 0
    %365 = vmatpush1.bf16.msra.mxu0 0
    %366 = vmatprep.subr.bf16.mxu0 0
    %367 = vmatpush1.bf16.msra.mxu0 0
    %368 = vmatprep.subr.bf16.mxu0 0
    %369 = vmatpush1.bf16.msra.mxu0 0
    %370 = vmatprep.subr.bf16.mxu0 0
    %371 = vmatpush1.bf16.msra.mxu0 0
    %372 = vmatprep.subr.bf16.mxu0 0
    %373 = vmatpush1.bf16.msra.mxu0 0
    %374 = vmatprep.subr.bf16.mxu0 0
    %375 = vmatpush1.bf16.msra.mxu0 0
    %376 = vmatprep.subr.bf16.mxu0 0
    %377 = vmatpush1.bf16.msra.mxu0 0
    %378 = vmatprep.subr.bf16.mxu0 0
    %379 = vmatpush1.bf16.msra.mxu0 0
    %380 = vmatprep.subr.bf16.mxu0 0
    %381 = vmatpush1.bf16.msra.mxu0 0
    %382 = vmatprep.subr.bf16.mxu0 0
    %383 = vmatpush1.bf16.msra.mxu0 0
    %384 = vmatprep.mubr.bf16.mxu0 0
    %385 = vmatmul.mubr.bf16.gmra.mrb[0].mxu0 %v350
    %v386 = vpop.f32.mrb[0].mxu0
    %v387 = vadd.f32 0.0, %v386
    %v388 = vpop.f32.mrb[0].mxu0
    %v389 = vpop.f32.mrb[0].mxu0
    %v390 = vpop.f32.mrb[0].mxu0
    %391 = vdwg.mxu0
    %v393 = vrot.slane %v387, 2
    %v395 = vadd.f32 %v86, %v393
    %v396 = vxor.u32 %v395, 2147483648
    %v397 = vmul.f32 %v396, 1.442695
    %v398 = vpow.pop %v397
    %v399 = vadd.f32 %v398, 1.0
    %v400 = vrcp.pop %v399
    %v401 = vmul.f32 1.0, %v400
    %v402 = vtanh.pop %v395
    %v404 = vrot.slane %v318, 6
    %v406 = vmul.f32 %v401, %v404
    %408 = vrot.lane.b32.xlu0 %v402, 64
    %v409 = vpop.permute.xlu0 %408
    %v411 = vmul.f32 %v401, %v409
    %413 = vrot.lane.b32.xlu0 %v411, 32
    %v414 = vpop.permute.xlu0 %413
    %v416 = vadd.f32 %v406, %v414
    %v417 = vtanh.pop %v416
    %419 = vrot.lane.b32.xlu0 %v417, 64
    %v420 = vpop.permute.xlu0 %419
    %v422 = vmul.f32 %v401, %v420
    %v424 = vcombine.high %v422, %v422
    %v426 = vunpack.c.l.s4 1983009808
    %v427 = vunpack.c.0.s8 %v426
    %v428 = vlaneseq
    %v429 = vshrl.u32 %v428, 7
    %v430 = vsub.s32 %v427, %v429
    %v431 = vrot.slane %v424, %v430
    %v432 = vcombine.high %v431, %v431
    %433 = vrot.lane.b32.xlu0 %v432, 96
    %v434 = vpop.permute.xlu0 %433
    %436 = vst.msk [vmem:[#allocation2 + $0x2] sm:$0x1] %vm239, %v434
    %v437 = vrot.slane %v432, 7
    %v438 = vrot.slane %v437, 2
    %440 = vst.msk [vmem:[#allocation2 + $0x2] sm:$0x1] %vm244, %v438
    %v441 = vpack.c.bf16 %v422, %v422
    %v443 = vrot.slane %v441, 3
    %444 = vrot.lane.b32.xlu0 %v443, 32
    %v445 = vpop.permute.xlu0 %444
    %v447 = vsel %vm150, %v445, 0
    %449 = vmatprep.subr.bf16.mxu0 0
    %450 = vmatpush1.bf16.msra.mxu0 %v146
    %451 = vmatprep.subr.bf16.mxu0 0
    %452 = vmatpush1.bf16.msra.mxu0 %v147
    %453 = vmatprep.subr.bf16.mxu0 0
    %454 = vmatpush1.bf16.msra.mxu0 0
    %455 = vmatprep.subr.bf16.mxu0 0
    %456 = vmatpush1.bf16.msra.mxu0 0
    %457 = vmatprep.subr.bf16.mxu0 0
    %458 = vmatpush1.bf16.msra.mxu0 0
    %459 = vmatprep.subr.bf16.mxu0 0
    %460 = vmatpush1.bf16.msra.mxu0 0
    %461 = vmatprep.subr.bf16.mxu0 0
    %462 = vmatpush1.bf16.msra.mxu0 0
    %463 = vmatprep.subr.bf16.mxu0 0
    %464 = vmatpush1.bf16.msra.mxu0 0
    %465 = vmatprep.subr.bf16.mxu0 0
    %466 = vmatpush1.bf16.msra.mxu0 0
    %467 = vmatprep.subr.bf16.mxu0 0
    %468 = vmatpush1.bf16.msra.mxu0 0
    %469 = vmatprep.subr.bf16.mxu0 0
    %470 = vmatpush1.bf16.msra.mxu0 0
    %471 = vmatprep.subr.bf16.mxu0 0
    %472 = vmatpush1.bf16.msra.mxu0 0
    %473 = vmatprep.subr.bf16.mxu0 0
    %474 = vmatpush1.bf16.msra.mxu0 0
    %475 = vmatprep.subr.bf16.mxu0 0
    %476 = vmatpush1.bf16.msra.mxu0 0
    %477 = vmatprep.subr.bf16.mxu0 0
    %478 = vmatpush1.bf16.msra.mxu0 0
    %479 = vmatprep.subr.bf16.mxu0 0
    %480 = vmatpush1.bf16.msra.mxu0 0
    %481 = vmatprep.mubr.bf16.mxu0 0
    %482 = vmatmul.mubr.bf16.gmra.mrb[0].mxu0 %v447
    %v483 = vpop.f32.mrb[0].mxu0
    %v484 = vadd.f32 0.0, %v483
    %v485 = vpop.f32.mrb[0].mxu0
    %v486 = vpop.f32.mrb[0].mxu0
    %v487 = vpop.f32.mrb[0].mxu0
    %488 = vdwg.mxu0
    %v489 = vadd.f32 %v89, %v484
    %v490 = vxor.u32 %v489, 2147483648
    %v491 = vmul.f32 %v490, 1.442695
    %v492 = vpow.pop %v491
    %v493 = vadd.f32 %v492, 1.0
    %v494 = vrcp.pop %v493
    %v495 = vmul.f32 1.0, %v494
    %v496 = vtanh.pop %v489
    %v498 = vrot.slane %v416, 6
    %v500 = vmul.f32 %v495, %v498
    %502 = vrot.lane.b32.xlu0 %v496, 64
    %v503 = vpop.permute.xlu0 %502
    %v505 = vmul.f32 %v495, %v503
    %507 = vrot.lane.b32.xlu0 %v505, 32
    %v508 = vpop.permute.xlu0 %507
    %v510 = vadd.f32 %v500, %v508
    %v511 = vtanh.pop %v510
    %513 = vrot.lane.b32.xlu0 %v511, 64
    %v514 = vpop.permute.xlu0 %513
    %v516 = vmul.f32 %v495, %v514
    %v519 = vunpack.c.l.s4 1983009808
    %v520 = vunpack.c.0.s8 %v519
    %v521 = vlaneseq
    %v522 = vshrl.u32 %v521, 7
    %v523 = vsub.s32 %v520, %v522
    %v524 = vrot.slane %v516, %v523
    %525 = vrot.lane.b32.xlu0 %v524, 32
    %v526 = vpop.permute.xlu0 %525
    %528 = vst.msk [vmem:[#allocation2 + $0x1] sm:$0x1] %vm125, %v526
    %v529 = vrot.slane %v524, 7
    %v530 = vrot.slane %v529, 2
    %531 = vrot.lane.b32.xlu0 %v530, 64
    %v532 = vpop.permute.xlu0 %531
    %534 = vst.msk [vmem:[#allocation2 + $0x1] sm:$0x1] %vm132, %v532
    %v535 = vpack.c.bf16 %v516, %v516
    %537 = vrot.lane.b32.xlu0 %v535, 32
    %v538 = vpop.permute.xlu0 %537
    %v540 = vsel %vm150, %v538, 0
    %542 = vmatprep.subr.bf16.mxu0 0
    %543 = vmatpush1.bf16.msra.mxu0 %v146
    %544 = vmatprep.subr.bf16.mxu0 0
    %545 = vmatpush1.bf16.msra.mxu0 %v147
    %546 = vmatprep.subr.bf16.mxu0 0
    %547 = vmatpush1.bf16.msra.mxu0 0
    %548 = vmatprep.subr.bf16.mxu0 0
    %549 = vmatpush1.bf16.msra.mxu0 0
    %550 = vmatprep.subr.bf16.mxu0 0
    %551 = vmatpush1.bf16.msra.mxu0 0
    %552 = vmatprep.subr.bf16.mxu0 0
    %553 = vmatpush1.bf16.msra.mxu0 0
    %554 = vmatprep.subr.bf16.mxu0 0
    %555 = vmatpush1.bf16.msra.mxu0 0
    %556 = vmatprep.subr.bf16.mxu0 0
    %557 = vmatpush1.bf16.msra.mxu0 0
    %558 = vmatprep.subr.bf16.mxu0 0
    %559 = vmatpush1.bf16.msra.mxu0 0
    %560 = vmatprep.subr.bf16.mxu0 0
    %561 = vmatpush1.bf16.msra.mxu0 0
    %562 = vmatprep.subr.bf16.mxu0 0
    %563 = vmatpush1.bf16.msra.mxu0 0
    %564 = vmatprep.subr.bf16.mxu0 0
    %565 = vmatpush1.bf16.msra.mxu0 0
    %566 = vmatprep.subr.bf16.mxu0 0
    %567 = vmatpush1.bf16.msra.mxu0 0
    %568 = vmatprep.subr.bf16.mxu0 0
    %569 = vmatpush1.bf16.msra.mxu0 0
    %570 = vmatprep.subr.bf16.mxu0 0
    %571 = vmatpush1.bf16.msra.mxu0 0
    %572 = vmatprep.subr.bf16.mxu0 0
    %573 = vmatpush1.bf16.msra.mxu0 0
    %574 = vmatprep.mubr.bf16.mxu0 0
    %575 = vmatmul.mubr.bf16.gmra.mrb[0].mxu0 %v540
    %v576 = vpop.f32.mrb[0].mxu0
    %v577 = vadd.f32 0.0, %v576
    %v578 = vpop.f32.mrb[0].mxu0
    %v579 = vpop.f32.mrb[0].mxu0
    %v580 = vpop.f32.mrb[0].mxu0
    %581 = vdwg.mxu0
    %v583 = vrot.slane %v577, 6
    %v585 = vadd.f32 %v89, %v583
    %v586 = vxor.u32 %v585, 2147483648
    %v587 = vmul.f32 %v586, 1.442695
    %v588 = vpow.pop %v587
    %v589 = vadd.f32 %v588, 1.0
    %v590 = vrcp.pop %v589
    %v591 = vmul.f32 1.0, %v590
    %v592 = vtanh.pop %v585
    %v594 = vrot.slane %v510, 6
    %v596 = vmul.f32 %v591, %v594
    %598 = vrot.lane.b32.xlu0 %v592, 64
    %v599 = vpop.permute.xlu0 %598
    %v601 = vmul.f32 %v591, %v599
    %603 = vrot.lane.b32.xlu0 %v601, 32
    %v604 = vpop.permute.xlu0 %603
    %v606 = vadd.f32 %v596, %v604
    %v607 = vtanh.pop %v606
    %609 = vrot.lane.b32.xlu0 %v607, 64
    %v610 = vpop.permute.xlu0 %609
    %v612 = vmul.f32 %v591, %v610
    %v615 = vunpack.c.l.s4 1983009808
    %v616 = vunpack.c.0.s8 %v615
    %v617 = vlaneseq
    %v618 = vshrl.u32 %v617, 7
    %v619 = vsub.s32 %v616, %v618
    %v620 = vrot.slane %v612, %v619
    %v621 = vcombine.high %v620, %v620
    %622 = vrot.lane.b32.xlu0 %v621, 96
    %v623 = vpop.permute.xlu0 %622
    %625 = vst.msk [vmem:[#allocation2 + $0x1] sm:$0x1] %vm239, %v623
    %v626 = vrot.slane %v621, 7
    %v627 = vrot.slane %v626, 2
    %629 = vst.msk [vmem:[#allocation2 + $0x1] sm:$0x1] %vm244, %v627
    %v630 = vpack.c.bf16 %v612, %v612
    %v632 = vrot.slane %v630, 1
    %633 = vrot.lane.b32.xlu0 %v632, 32
    %v634 = vpop.permute.xlu0 %633
    %v636 = vsel %vm150, %v634, 0
    %638 = vmatprep.subr.bf16.mxu0 0
    %639 = vmatpush1.bf16.msra.mxu0 %v146
    %640 = vmatprep.subr.bf16.mxu0 0
    %641 = vmatpush1.bf16.msra.mxu0 %v147
    %642 = vmatprep.subr.bf16.mxu0 0
    %643 = vmatpush1.bf16.msra.mxu0 0
    %644 = vmatprep.subr.bf16.mxu0 0
    %645 = vmatpush1.bf16.msra.mxu0 0
    %646 = vmatprep.subr.bf16.mxu0 0
    %647 = vmatpush1.bf16.msra.mxu0 0
    %648 = vmatprep.subr.bf16.mxu0 0
    %649 = vmatpush1.bf16.msra.mxu0 0
    %650 = vmatprep.subr.bf16.mxu0 0
    %651 = vmatpush1.bf16.msra.mxu0 0
    %652 = vmatprep.subr.bf16.mxu0 0
    %653 = vmatpush1.bf16.msra.mxu0 0
    %654 = vmatprep.subr.bf16.mxu0 0
    %655 = vmatpush1.bf16.msra.mxu0 0
    %656 = vmatprep.subr.bf16.mxu0 0
    %657 = vmatpush1.bf16.msra.mxu0 0
    %658 = vmatprep.subr.bf16.mxu0 0
    %659 = vmatpush1.bf16.msra.mxu0 0
    %660 = vmatprep.subr.bf16.mxu0 0
    %661 = vmatpush1.bf16.msra.mxu0 0
    %662 = vmatprep.subr.bf16.mxu0 0
    %663 = vmatpush1.bf16.msra.mxu0 0
    %664 = vmatprep.subr.bf16.mxu0 0
    %665 = vmatpush1.bf16.msra.mxu0 0
    %666 = vmatprep.subr.bf16.mxu0 0
    %667 = vmatpush1.bf16.msra.mxu0 0
    %668 = vmatprep.subr.bf16.mxu0 0
    %669 = vmatpush1.bf16.msra.mxu0 0
    %670 = vmatprep.mubr.bf16.mxu0 0
    %671 = vmatmul.mubr.bf16.gmra.mrb[0].mxu0 %v636
    %v672 = vpop.f32.mrb[0].mxu0
    %v673 = vadd.f32 0.0, %v672
    %v674 = vpop.f32.mrb[0].mxu0
    %v675 = vpop.f32.mrb[0].mxu0
    %v676 = vpop.f32.mrb[0].mxu0
    %677 = vdwg.mxu0
    %v679 = vrot.slane %v673, 4
    %v681 = vadd.f32 %v89, %v679
    %v682 = vxor.u32 %v681, 2147483648
    %v683 = vmul.f32 %v682, 1.442695
    %v684 = vpow.pop %v683
    %v685 = vadd.f32 %v684, 1.0
    %v686 = vrcp.pop %v685
    %v687 = vmul.f32 1.0, %v686
    %v688 = vtanh.pop %v681
    %v690 = vrot.slane %v606, 6
    %v692 = vmul.f32 %v687, %v690
    %694 = vrot.lane.b32.xlu0 %v688, 64
    %v695 = vpop.permute.xlu0 %694
    %v697 = vmul.f32 %v687, %v695
    %699 = vrot.lane.b32.xlu0 %v697, 32
    %v700 = vpop.permute.xlu0 %699
    %v702 = vadd.f32 %v692, %v700
    %v703 = vtanh.pop %v702
    %705 = vrot.lane.b32.xlu0 %v703, 64
    %v706 = vpop.permute.xlu0 %705
    %v708 = vmul.f32 %v687, %v706
    %v710 = vcombine.high %v708, %v708
    %v712 = vunpack.c.l.s4 1983009808
    %v713 = vunpack.c.0.s8 %v712
    %v714 = vlaneseq
    %v715 = vshrl.u32 %v714, 7
    %v716 = vsub.s32 %v713, %v715
    %v717 = vrot.slane %v710, %v716
    %718 = vrot.lane.b32.xlu0 %v717, 32
    %v719 = vpop.permute.xlu0 %718
    %721 = vst.msk [vmem:[#allocation2 + $0x3] sm:$0x1] %vm125, %v719
    %v722 = vrot.slane %v717, 7
    %v723 = vrot.slane %v722, 2
    %724 = vrot.lane.b32.xlu0 %v723, 64
    %v725 = vpop.permute.xlu0 %724
    %727 = vst.msk [vmem:[#allocation2 + $0x3] sm:$0x1] %vm132, %v725
    %v728 = vpack.c.bf16 %v708, %v708
    %v730 = vrot.slane %v728, 2
    %731 = vrot.lane.b32.xlu0 %v730, 32
    %v732 = vpop.permute.xlu0 %731
    %v734 = vsel %vm150, %v732, 0
    %736 = vmatprep.subr.bf16.mxu0 0
    %737 = vmatpush1.bf16.msra.mxu0 %v146
    %738 = vmatprep.subr.bf16.mxu0 0
    %739 = vmatpush1.bf16.msra.mxu0 %v147
    %740 = vmatprep.subr.bf16.mxu0 0
    %741 = vmatpush1.bf16.msra.mxu0 0
    %742 = vmatprep.subr.bf16.mxu0 0
    %743 = vmatpush1.bf16.msra.mxu0 0
    %744 = vmatprep.subr.bf16.mxu0 0
    %745 = vmatpush1.bf16.msra.mxu0 0
    %746 = vmatprep.subr.bf16.mxu0 0
    %747 = vmatpush1.bf16.msra.mxu0 0
    %748 = vmatprep.subr.bf16.mxu0 0
    %749 = vmatpush1.bf16.msra.mxu0 0
    %750 = vmatprep.subr.bf16.mxu0 0
    %751 = vmatpush1.bf16.msra.mxu0 0
    %752 = vmatprep.subr.bf16.mxu0 0
    %753 = vmatpush1.bf16.msra.mxu0 0
    %754 = vmatprep.subr.bf16.mxu0 0
    %755 = vmatpush1.bf16.msra.mxu0 0
    %756 = vmatprep.subr.bf16.mxu0 0
    %757 = vmatpush1.bf16.msra.mxu0 0
    %758 = vmatprep.subr.bf16.mxu0 0
    %759 = vmatpush1.bf16.msra.mxu0 0
    %760 = vmatprep.subr.bf16.mxu0 0
    %761 = vmatpush1.bf16.msra.mxu0 0
    %762 = vmatprep.subr.bf16.mxu0 0
    %763 = vmatpush1.bf16.msra.mxu0 0
    %764 = vmatprep.subr.bf16.mxu0 0
    %765 = vmatpush1.bf16.msra.mxu0 0
    %766 = vmatprep.subr.bf16.mxu0 0
    %767 = vmatpush1.bf16.msra.mxu0 0
    %768 = vmatprep.mubr.bf16.mxu0 0
    %769 = vmatmul.mubr.bf16.gmra.mrb[0].mxu0 %v734
    %v770 = vpop.f32.mrb[0].mxu0
    %v771 = vadd.f32 0.0, %v770
    %v772 = vpop.f32.mrb[0].mxu0
    %v773 = vpop.f32.mrb[0].mxu0
    %v774 = vpop.f32.mrb[0].mxu0
    %775 = vdwg.mxu0
    %v777 = vrot.slane %v771, 2
    %v779 = vadd.f32 %v89, %v777
    %v780 = vxor.u32 %v779, 2147483648
    %v781 = vmul.f32 %v780, 1.442695
    %v782 = vpow.pop %v781
    %v783 = vadd.f32 %v782, 1.0
    %v784 = vrcp.pop %v783
    %v785 = vmul.f32 1.0, %v784
    %v786 = vtanh.pop %v779
    %v788 = vrot.slane %v702, 6
    %v790 = vmul.f32 %v785, %v788
    %792 = vrot.lane.b32.xlu0 %v786, 64
    %v793 = vpop.permute.xlu0 %792
    %v795 = vmul.f32 %v785, %v793
    %797 = vrot.lane.b32.xlu0 %v795, 32
    %v798 = vpop.permute.xlu0 %797
    %v800 = vadd.f32 %v790, %v798
    %v801 = vtanh.pop %v800
    %803 = vrot.lane.b32.xlu0 %v801, 64
    %v804 = vpop.permute.xlu0 %803
    %v806 = vmul.f32 %v785, %v804
    %v808 = vcombine.high %v806, %v806
    %v810 = vunpack.c.l.s4 1983009808
    %v811 = vunpack.c.0.s8 %v810
    %v812 = vlaneseq
    %v813 = vshrl.u32 %v812, 7
    %v814 = vsub.s32 %v811, %v813
    %v815 = vrot.slane %v808, %v814
    %v816 = vcombine.high %v815, %v815
    %817 = vrot.lane.b32.xlu0 %v816, 96
    %v818 = vpop.permute.xlu0 %817
    %820 = vst.msk [vmem:[#allocation2 + $0x3] sm:$0x1] %vm239, %v818
    %v821 = vrot.slane %v816, 7
    %v822 = vrot.slane %v821, 2
    %824 = vst.msk [vmem:[#allocation2 + $0x3] sm:$0x1] %vm244, %v822
    %v825 = vld [vmem:[#allocation2] sm:$0xf]
    %v828 = vunpack.c.l.s4 1983009808
    %v829 = vunpack.c.0.s8 %v828
    %v830 = vlaneseq
    %v831 = vshrl.u32 %v830, 7
    %v832 = vsub.s32 %v829, %v831
    %v833 = vrot.slane %v825, %v832
    %v834 = vcombine.high %v833, %v833
    %v837 = vpack.c.bf16 %v833, %v833
    %v838 = vpack.c.bf16 %v834, %v834
    %v839 = vld [vmem:[%s4] sm:$0xf]
    %v840 = vld [vmem:[%s4 + $0x4] sm:$0xf]
    %v841 = vld [vmem:[%s4 + $0x8] sm:$0xf]
    %v842 = vld [vmem:[%s4 + $0xc] sm:$0xf]
    %v843 = vld [vmem:[%s4 + $0x10] sm:$0xf]
    %v844 = vld [vmem:[%s4 + $0x14] sm:$0xf]
    %v845 = vld [vmem:[%s4 + $0x18] sm:$0xf]
    %v846 = vld [vmem:[%s4 + $0x1c] sm:$0xf]
    %v847 = vld [vmem:[%s4 + $0x20] sm:$0xf]
    %v848 = vld [vmem:[%s4 + $0x24] sm:$0xf]
    %v849 = vld [vmem:[%s4 + $0x28] sm:$0xf]
    %v850 = vld [vmem:[%s4 + $0x2c] sm:$0xf]
    %v851 = vld [vmem:[%s4 + $0x30] sm:$0xf]
    %v852 = vld [vmem:[%s4 + $0x34] sm:$0xf]
    %v853 = vld [vmem:[%s4 + $0x38] sm:$0xf]
    %v854 = vld [vmem:[%s4 + $0x3c] sm:$0xf]
    %v855 = vld [vmem:[%s4 + $0x40] sm:$0xf]
    %v856 = vld [vmem:[%s4 + $0x44] sm:$0xf]
    %v857 = vld [vmem:[%s4 + $0x48] sm:$0xf]
    %v858 = vld [vmem:[%s4 + $0x4c] sm:$0xf]
    %v859 = vld [vmem:[%s4 + $0x50] sm:$0xf]
    %v860 = vld [vmem:[%s4 + $0x54] sm:$0xf]
    %v861 = vld [vmem:[%s4 + $0x58] sm:$0xf]
    %v862 = vld [vmem:[%s4 + $0x5c] sm:$0xf]
    %v863 = vld [vmem:[%s4 + $0x60] sm:$0xf]
    %v864 = vld [vmem:[%s4 + $0x64] sm:$0xf]
    %v865 = vld [vmem:[%s4 + $0x68] sm:$0xf]
    %v866 = vld [vmem:[%s4 + $0x6c] sm:$0xf]
    %v867 = vld [vmem:[%s4 + $0x70] sm:$0xf]
    %v868 = vld [vmem:[%s4 + $0x74] sm:$0xf]
    %v869 = vld [vmem:[%s4 + $0x78] sm:$0xf]
    %v870 = vld [vmem:[%s4 + $0x7c] sm:$0xf]
    %v871 = vld [vmem:[%s5] sm:$0x1]
    %v873 = vlaneseq
    %v874 = vshrl.u32 %v873, 7
    %v875 = vsub.s32 0, %v874
    %v876 = vrot.slane %v871, %v875
    %v910 = vunpack.c.l.b16 %v839
    %v911 = vunpack.c.l.b16 %v840
    %v912 = vunpack.c.l.b16 %v841
    %v913 = vunpack.c.l.b16 %v842
    %v914 = vunpack.c.l.b16 %v843
    %v915 = vunpack.c.l.b16 %v844
    %v916 = vunpack.c.l.b16 %v845
    %v917 = vunpack.c.l.b16 %v846
    %v918 = vunpack.c.l.b16 %v847
    %v919 = vunpack.c.l.b16 %v848
    %v920 = vunpack.c.l.b16 %v849
    %v921 = vunpack.c.l.b16 %v850
    %v922 = vunpack.c.l.b16 %v851
    %v923 = vunpack.c.l.b16 %v852
    %v924 = vunpack.c.l.b16 %v853
    %v925 = vunpack.c.l.b16 %v854
    %v926 = vunpack.c.l.b16 %v855
    %v927 = vunpack.c.l.b16 %v856
    %v928 = vunpack.c.l.b16 %v857
    %v929 = vunpack.c.l.b16 %v858
    %v930 = vunpack.c.l.b16 %v859
    %v931 = vunpack.c.l.b16 %v860
    %v932 = vunpack.c.l.b16 %v861
    %v933 = vunpack.c.l.b16 %v862
    %v934 = vunpack.c.l.b16 %v863
    %v935 = vunpack.c.l.b16 %v864
    %v936 = vunpack.c.l.b16 %v865
    %v937 = vunpack.c.l.b16 %v866
    %v938 = vunpack.c.l.b16 %v867
    %v939 = vunpack.c.l.b16 %v868
    %v940 = vunpack.c.l.b16 %v869
    %v941 = vunpack.c.l.b16 %v870
    %v942 = vpack.c.b16 %v911, %v910
    %v943 = vpack.c.b16 %v913, %v912
    %v944 = vpack.c.b16 %v915, %v914
    %v945 = vpack.c.b16 %v917, %v916
    %v946 = vpack.c.b16 %v919, %v918
    %v947 = vpack.c.b16 %v921, %v920
    %v948 = vpack.c.b16 %v923, %v922
    %v949 = vpack.c.b16 %v925, %v924
    %v950 = vpack.c.b16 %v927, %v926
    %v951 = vpack.c.b16 %v929, %v928
    %v952 = vpack.c.b16 %v931, %v930
    %v953 = vpack.c.b16 %v933, %v932
    %v954 = vpack.c.b16 %v935, %v934
    %v955 = vpack.c.b16 %v937, %v936
    %v956 = vpack.c.b16 %v939, %v938
    %v957 = vpack.c.b16 %v941, %v940
    %974 = vmatprep.subr.bf16.mxu0 0
    %975 = vmatpush1.bf16.msra.mxu0 %v942
    %976 = vmatprep.subr.bf16.mxu0 0
    %977 = vmatpush1.bf16.msra.mxu0 %v943
    %978 = vmatprep.subr.bf16.mxu0 0
    %979 = vmatpush1.bf16.msra.mxu0 %v944
    %980 = vmatprep.subr.bf16.mxu0 0
    %981 = vmatpush1.bf16.msra.mxu0 %v945
    %982 = vmatprep.subr.bf16.mxu0 0
    %983 = vmatpush1.bf16.msra.mxu0 %v946
    %984 = vmatprep.subr.bf16.mxu0 0
    %985 = vmatpush1.bf16.msra.mxu0 %v947
    %986 = vmatprep.subr.bf16.mxu0 0
    %987 = vmatpush1.bf16.msra.mxu0 %v948
    %988 = vmatprep.subr.bf16.mxu0 0
    %989 = vmatpush1.bf16.msra.mxu0 %v949
    %990 = vmatprep.subr.bf16.mxu0 0
    %991 = vmatpush1.bf16.msra.mxu0 %v950
    %992 = vmatprep.subr.bf16.mxu0 0
    %993 = vmatpush1.bf16.msra.mxu0 %v951
    %994 = vmatprep.subr.bf16.mxu0 0
    %995 = vmatpush1.bf16.msra.mxu0 %v952
    %996 = vmatprep.subr.bf16.mxu0 0
    %997 = vmatpush1.bf16.msra.mxu0 %v953
    %998 = vmatprep.subr.bf16.mxu0 0
    %999 = vmatpush1.bf16.msra.mxu0 %v954
    %1000 = vmatprep.subr.bf16.mxu0 0
    %1001 = vmatpush1.bf16.msra.mxu0 %v955
    %1002 = vmatprep.subr.bf16.mxu0 0
    %1003 = vmatpush1.bf16.msra.mxu0 %v956
    %1004 = vmatprep.subr.bf16.mxu0 0
    %1005 = vmatpush1.bf16.msra.mxu0 %v957
    %1006 = vmatprep.mubr.bf16.mxu0 %v838
    %1007 = vmatmul.mubr.bf16.gmra.mrb[0].mxu0 %v837
    %v1008 = vpop.f32.mrb[0].mxu0
    %v1009 = vadd.f32 %v876, %v1008
    %v1010 = vpop.f32.mrb[0].mxu0
    %v1011 = vpop.f32.mrb[0].mxu0
    %v1012 = vpop.f32.mrb[0].mxu0
    %1013 = vdwg.mxu0
    %vm1014 = vcmask 58368
    %1015 = vst.msk [vmem:[#allocation3] sm:$0x3] %vm1014, %v1009
    // Predicated region
    $region26: #{jarvis_lstm_forward.1} parent=1 // pred_check
      _
    $region27: #{jarvis_lstm_forward.1} parent=1 // pred_check_branch
      %1017 = sbr.rel (0) target = $region29
    $region28: #{jarvis_lstm_forward.1} parent=1 // pred_region
      %s1019 = ssub.s32 32, 32
      %1020 = vsyncadd [#allocation4], %s1019
      %s1022 = sshll.u32 [#allocation3], 4
      %s1023 = int_to_ptr.vmem [resolvable:$true] %s1022
      %1025 = dma.vmem_to_hbm [thread:$0]  %s1023, 32, %s6, [#allocation4]
    $region29: #{jarvis_lstm_forward.1} parent=1 // pred_fallthru
      _
    // Predicated region
    $region30: #{jarvis_lstm_forward.1} parent=1 // pred_check
      _
    $region31: #{jarvis_lstm_forward.1} parent=1 // pred_check_branch
      %1027 = sbr.rel (0) target = $region33
    $region32: #{jarvis_lstm_forward.1} parent=1 // pred_region
      %1028 = dma.done [#allocation4], 32
    $region33: #{jarvis_lstm_forward.1} parent=1 // pred_fallthru
      _
    %1029 = vsyncpa [#allocation4], 1

</llo_original>
